<compile_context>
chip_gen: v7x
topology: tpu7x:2x2x1
jax: 0.10.0
libtpu: 0.0.40
codegen_flags: <defaults>
</compile_context>

<pallas_src>
import jax
import jax.numpy as jnp
from jax.experimental import pallas as pl
from jax.experimental.pallas import tpu as pltpu

# Problems whose total output is smaller than this bypass Pallas entirely.
_FAST_PATH_BYTES = 256 * 1024


def _concat_kernel(x_ref, clin_ref, out_ref):
    """Concatenate one batch tile of x and clinic_info along the feature axis.

    x_ref:    (TN, F1) block in VMEM
    clin_ref: (TN, F2) block in VMEM
    out_ref:  (TN, F1 + F2) block in VMEM
    """
    # Assemble the full (TN, F1+F2) row tile in-register, then issue ONE
    # lane-dense store (avoids a masked store at a lane offset inside a vreg).
    out_ref[...] = jnp.concatenate(
        [x_ref[...].astype(out_ref.dtype),
         clin_ref[...].astype(out_ref.dtype)],
        axis=-1,
    )


def _round_up(v, m):
    return -(-v // m) * m


def _chip_tuning():
    """(block budget bytes, min grid steps) for the local TPU generation."""
    try:
        kind = jax.devices()[0].device_kind.lower()
    except Exception:  # pragma: no cover - defensive
        kind = ""
    if "v7" in kind:
        # 32 MiB default scoped VMEM (64 MiB physical / TC); keep >= 2
        # steps per TensorCore so pipelining + megacore sharding survive.
        return 22 << 20, 4
    if "v6" in kind:
        # 32 MiB default scoped VMEM — use ~22 MiB, leave Mosaic headroom.
        return 22 << 20, 2
    # v5e (16 MiB default scoped VMEM) and unknown chips: conservative.
    return 10 << 20, 2


def clinical_cls_forward(x, clinic_info, *, force_kernel=False):
    """JAX equivalent of Clinical_cls.forward == torch.cat((x, c), dim=1).

    x:           (N, F1)
    clinic_info: (N, F2)
    returns:     (N, F1 + F2)

    Note: mixed input dtypes silently promote (jnp semantics, close to
    torch.result_type behaviour for cat).
    """
    assert x.ndim == 2 and clinic_info.ndim == 2
    assert x.shape[0] == clinic_info.shape[0], "batch dims must match"
    n, f1 = x.shape
    _, f2 = clinic_info.shape
    f_out = f1 + f2
    out_dtype = jnp.promote_types(x.dtype, clinic_info.dtype)
    out_itemsize = jnp.dtype(out_dtype).itemsize

    # --- Fast path: tiny problems are dominated by kernel-launch overhead. ---
    if not force_kernel and n * f_out * out_itemsize < _FAST_PATH_BYTES:
        return jnp.concatenate([x.astype(out_dtype),
                                clinic_info.astype(out_dtype)], axis=1)

    # --- Padding-aware VMEM sizing for the double-buffered pipeline. ---
    # Each VMEM block is lane-padded to a multiple of 128; x, clinic and out
    # blocks are each double-buffered by the BlockSpec pipeline.
    x_item = jnp.dtype(x.dtype).itemsize
    c_item = jnp.dtype(clinic_info.dtype).itemsize
    per_row_bytes = 2 * (_round_up(f1, 128) * x_item
                         + _round_up(f2, 128) * c_item
                         + _round_up(f_out, 128) * out_itemsize)

    budget_bytes, min_steps = _chip_tuning()

    if n <= 32:
        # Block == full array dims: always a legal block shape.
        tn = n
    else:
        tn = budget_bytes // max(per_row_bytes, 1)
        tn = max(32, (tn // 32) * 32)     # multiple of 32 sublanes
        tn = min(tn, n)
        # Keep at least `min_steps` grid steps when the problem is big enough
        # (pipelining; >= 2 steps per TC on v7x for the megacore split).
        if pl.cdiv(n, tn) < min_steps and (n // min_steps) >= 32:
            tn = max(32, (n // min_steps // 32) * 32)

    grid = (pl.cdiv(n, tn),)

    return pl.pallas_call(
        _concat_kernel,
        out_shape=jax.ShapeDtypeStruct((n, f_out), out_dtype),
        grid=grid,
        in_specs=[
            pl.BlockSpec((tn, f1), lambda i: (i, 0)),
            pl.BlockSpec((tn, f2), lambda i: (i, 0)),
        ],
        out_specs=pl.BlockSpec((tn, f_out), lambda i: (i, 0)),
        compiler_params=pltpu.CompilerParams(
            dimension_semantics=("parallel",)),
    )(x, clinic_info)


if __name__ == "__main__":
    key = jax.random.PRNGKey(0)
    kx, kc = jax.random.split(key)

    # Small shapes consistent with the module: batch=2, image-feature dim=32,
    # clinical-feature dim=16.  (num_classes=7 is unused — simpleCls is an
    # empty nn.Sequential, i.e. identity.)
    batch, feat_x, feat_clin = 2, 32, 16
    x = jax.random.normal(kx, (batch, feat_x), dtype=jnp.float32)
    clinic_info = jax.random.normal(kc, (batch, feat_clin), dtype=jnp.float32)
    ref = jnp.concatenate([x, clinic_info], axis=1)

    # 1) Default path at the module's real shape -> jnp fast path.
    out_fast = jax.block_until_ready(clinical_cls_forward(x, clinic_info))
    assert out_fast.shape == (batch, feat_x + feat_clin), out_fast.shape
    assert jnp.array_equal(out_fast, ref), "fast-path mismatch vs reference"

    # 2) Force the Pallas kernel at the module's shape (block == full array).
    out_kern = jax.block_until_ready(
        clinical_cls_forward(x, clinic_info, force_kernel=True))
    assert jnp.array_equal(out_kern, ref), "kernel output mismatch vs reference"

    # 3) Larger batch to exercise the tiled, multi-step grid path.
    kx2, kc2 = jax.random.split(jax.random.PRNGKey(1))
    n_big = 4096
    xb = jax.random.normal(kx2, (n_big, feat_x), dtype=jnp.float32)
    cb = jax.random.normal(kc2, (n_big, feat_clin), dtype=jnp.float32)
    out_big = jax.block_until_ready(clinical_cls_forward(xb, cb))
    ref_big = jnp.concatenate([xb, cb], axis=1)
    assert jnp.array_equal(out_big, ref_big), "tiled kernel mismatch vs reference"

    print("KERNEL_OK")
</pallas_src>

<mosaic_0001>
module attributes {stable_mosaic.version = 11 : i64} {
  func.func @_concat_kernel(%arg0: i32, %arg1: memref<2x32xf32, #tpu.memory_space<vmem>>, %arg2: memref<2x16xf32, #tpu.memory_space<vmem>>, %arg3: memref<2x48xf32, #tpu.memory_space<vmem>>) attributes {dimension_semantics = [#tpu.dimension_semantics<parallel>], iteration_bounds = array<i64: 1>, scalar_prefetch = 0 : i64, scratch_operands = 0 : i64, tpu.core_type = #tpu.core_type<tc>, window_params = [{transform_indices = @transform_0, window_bounds = array<i64: 2, 32>}, {transform_indices = @transform_1, window_bounds = array<i64: 2, 16>}, {transform_indices = @transform_2, window_bounds = array<i64: 2, 48>}]} {
    %c0 = arith.constant 0 : index
    %c0_0 = arith.constant 0 : index
    %0 = vector.load %arg1[%c0, %c0_0] : memref<2x32xf32, #tpu.memory_space<vmem>>, vector<2x32xf32>
    %c0_1 = arith.constant 0 : index
    %c0_2 = arith.constant 0 : index
    %1 = vector.load %arg2[%c0_1, %c0_2] : memref<2x16xf32, #tpu.memory_space<vmem>>, vector<2x16xf32>
    %2 = tpu.concatenate %0, %1 in 1 : vector<2x32xf32>, vector<2x16xf32> -> vector<2x48xf32>
    %c0_3 = arith.constant 0 : index
    %c0_4 = arith.constant 0 : index
    %3 = vector.load %arg3[%c0_3, %c0_4] : memref<2x48xf32, #tpu.memory_space<vmem>>, vector<2x48xf32>
    tpu.vector_store %arg3[%c0_3, %c0_4], %2 {strides = array<i32>} : memref<2x48xf32, #tpu.memory_space<vmem>>, vector<2x48xf32>,
    return
  }
  func.func @transform_0(%arg0: i32) -> (i32, i32) {
    %c0_i32 = arith.constant 0 : i32
    %c0_i32_0 = arith.constant 0 : i32
    return %arg0, %c0_i32 : i32, i32
  }
  func.func @transform_1(%arg0: i32) -> (i32, i32) {
    %c0_i32 = arith.constant 0 : i32
    %c0_i32_0 = arith.constant 0 : i32
    return %arg0, %c0_i32 : i32, i32
  }
  func.func @transform_2(%arg0: i32) -> (i32, i32) {
    %c0_i32 = arith.constant 0 : i32
    %c0_i32_0 = arith.constant 0 : i32
    return %arg0, %c0_i32 : i32, i32
  }
}

</mosaic_0001>

<llo_original>
// kernel: tpu_custom_call.1
$region0: #{tpu_custom_call.1}
  #allocation0 [shape = 'u32[]', space=smem, size = 0x4, offset = 0x4, fixed_abs, tag = 'smem constant byte address 0x4 - core index']
  #allocation1 [shape = 'u32[144,128]{1,0:T(1,128)}', space=vmem, size = 0x12000, scoped, tag = 'internal scratch']
  %s0 = inlined_call_operand.hbm [shape: f32[2,32], index: 0, kind: input, shape index: {}]
  %s1 = inlined_call_operand.vmem [shape: f32[2,16], index: 1, kind: input, shape index: {}]
  %s2 = inlined_call_operand.hbm [shape: f32[2,48], index: 2, kind: output, shape index: {}]
  %s3 = sld [smem:[#allocation0]]
  $region22: #{tpu_custom_call.1} parent=0
    _
  %s5 = ssub.s32 1, %s3
  %s6 = scalar_select 0, %s5, %s3
  $region1: #{tpu_custom_call.1} parent=0
    #allocation2 [shape = 'u8[1024]{0}', space=vmem, size = 0x400, scoped, tag = 'input window, operand 0, single buffered']
    #allocation3 [shape = 's32[1]{0}', space=sflag, size = 0x4, scoped, tag = 'scoped memory for tpu_custom_call.1']
    #allocation4 [shape = 's32[1]{0}', space=sflag, size = 0x4, scoped, tag = 'scoped memory for tpu_custom_call.1']
    #allocation5 [shape = 'u8[1024]{0}', space=vmem, size = 0x400, scoped, tag = 'output window, operand 0, single buffered']
    %7 = vsyncpa [#allocation3], 0
    %8 = vsyncpa [#allocation4], 0
    // Predicated region
    $region2: #{tpu_custom_call.1} parent=1 // pred_check
      _
    $region3: #{tpu_custom_call.1} parent=1 // pred_check_branch
      %10 = sbr.rel (0) target = $region5
    $region4: #{tpu_custom_call.1} parent=1 // pred_region
      %s12 = ssub.s32 32, 32
      %13 = vsyncadd [#allocation3], %s12
      %s15 = sshll.u32 [#allocation2], 4
      %s16 = int_to_ptr.vmem [resolvable:$true] %s15
      %18 = dma.hbm_to_vmem [thread:$0]  %s0, 32, %s16, [#allocation3]
    $region5: #{tpu_custom_call.1} parent=1 // pred_fallthru
      _
    // Predicated region
    $region6: #{tpu_custom_call.1} parent=1 // pred_check
      _
    $region7: #{tpu_custom_call.1} parent=1 // pred_check_branch
      %20 = sbr.rel (0) target = $region9
    $region8: #{tpu_custom_call.1} parent=1 // pred_region
      _
    $region9: #{tpu_custom_call.1} parent=1 // pred_fallthru
      _
    // Predicated region
    $region10: #{tpu_custom_call.1} parent=1 // pred_check
      _
    $region11: #{tpu_custom_call.1} parent=1 // pred_check_branch
      %22 = sbr.rel (0) target = $region13
    $region12: #{tpu_custom_call.1} parent=1 // pred_region
      %23 = dma.done [#allocation3], 32
    $region13: #{tpu_custom_call.1} parent=1 // pred_fallthru
      _
    %v24 = vld [vmem:[#allocation2] sm:$0x3]
    %v25 = vld [vmem:[%s1] sm:$0x3]
    %27 = vrot.lane.b32.xlu0 %v25, 32
    %v28 = vpop.permute.xlu0 %27
    %vm30 = vcmask 261120
    %v31 = vsel %vm30, %v24, %v28
    %vm32 = vcmask 386048
    %33 = vst.msk [vmem:[#allocation5] sm:$0x3] %vm32, %v31
    // Predicated region
    $region14: #{tpu_custom_call.1} parent=1 // pred_check
      _
    $region15: #{tpu_custom_call.1} parent=1 // pred_check_branch
      %35 = sbr.rel (0) target = $region17
    $region16: #{tpu_custom_call.1} parent=1 // pred_region
      %s37 = ssub.s32 32, 32
      %38 = vsyncadd [#allocation4], %s37
      %s40 = sshll.u32 [#allocation5], 4
      %s41 = int_to_ptr.vmem [resolvable:$true] %s40
      %43 = dma.vmem_to_hbm [thread:$0]  %s41, 32, %s2, [#allocation4]
    $region17: #{tpu_custom_call.1} parent=1 // pred_fallthru
      _
    // Predicated region
    $region18: #{tpu_custom_call.1} parent=1 // pred_check
      _
    $region19: #{tpu_custom_call.1} parent=1 // pred_check_branch
      %45 = sbr.rel (0) target = $region21
    $region20: #{tpu_custom_call.1} parent=1 // pred_region
      %46 = dma.done [#allocation4], 32
    $region21: #{tpu_custom_call.1} parent=1 // pred_fallthru
      _
    %47 = vsyncpa [#allocation3], 1
    %48 = vsyncpa [#allocation4], 1

</llo_original>
